<compile_context>
chip_gen: v5e
topology: v5e:2x2
jax: 0.10.0
libtpu: 0.0.40
codegen_flags: <defaults>
</compile_context>

<pallas_src>
import jax
import jax.numpy as jnp
from jax.experimental import pallas as pl
from jax.experimental.pallas import tpu as pltpu


_TARGET_STEP_BYTES = 4 * 1024 * 1024   # per-step x DMA target (2-8 MiB sweet spot)
_MIN_STEP_BYTES = 1 * 1024 * 1024      # don't shrink below this just for megacore
_W_COL_VMEM_CAP = 8 * 1024 * 1024      # max VMEM for the (K,1) MXU weight column


def _round_up(x: int, m: int) -> int:
    return ((x + m - 1) // m) * m


def _cdiv(a: int, b: int) -> int:
    return -(-a // b)


def _vmem_config():
    """Return (vmem_limit_bytes, tile_budget_bytes) for the current TPU gen."""
    try:
        phys = int(pltpu.get_tpu_info().vmem_capacity_bytes)
    except Exception:
        phys = 64 * 1024 * 1024          # conservative: assume v7x-sized VMEM
    if phys >= 128 * 1024 * 1024:        # v5e / v6e (128 MiB physical)
        return 64 * 1024 * 1024, 32 * 1024 * 1024
    limit = min(48 * 1024 * 1024, (phys * 3) // 4)   # v7x (64 MiB physical)
    return limit, limit // 2


def _choose_block_rows(batch, n_inputs, x_itemsize, tile_budget, w_vmem_bytes):
    """Pick the batch tile TM using lane-padded VMEM footprints."""
    row_mult = 16 if x_itemsize < 4 else 8           # bf16 tiles are (16,128)
    if batch <= row_mult:
        return batch                                  # single full-array block
    k_lanes = _round_up(n_inputs, 128)
    in_row_bytes = x_itemsize * k_lanes               # lane-padded x row
    out_row_bytes = 4 * 128                           # (TM,1) tile padded to 128 lanes

    tm_target = max(row_mult, _TARGET_STEP_BYTES // in_row_bytes)
    avail = max(tile_budget - w_vmem_bytes,
                2 * row_mult * (in_row_bytes + out_row_bytes))
    tm_vmem = avail // (2 * (in_row_bytes + out_row_bytes))   # double-buffered
    tm = min(tm_target, tm_vmem)

    # Keep >=2 (prefer 4) grid steps so "parallel" can shard the batch across
    # v7x's two TensorCores — unless that would starve the per-step DMA.
    min_rows_dma = max(row_mult, _MIN_STEP_BYTES // in_row_bytes)
    quarter = _round_up(_cdiv(batch, 4), row_mult)
    half = _round_up(_cdiv(batch, 2), row_mult)
    if quarter >= min_rows_dma:
        tm = min(tm, quarter)
    elif half >= min_rows_dma:
        tm = min(tm, half)

    tm = min(tm, batch)
    return max(row_mult, (tm // row_mult) * row_mult)


def _classifier_kernel(x_ref, w_ref, b_ref, o_ref):
    # x_ref: (TM, K)  activations (f32 or bf16) in VMEM
    # w_ref: (K, 1)   f32 weight column (MXU path)  OR  (1, K) row (VPU path)
    # b_ref: (1,)     f32 bias in SMEM
    # o_ref: (TM, 1)  output in VMEM
    x = x_ref[...].astype(jnp.float32)
    if w_ref.shape[-1] == 1:
        # MXU reduction: (TM,K) @ (K,1) — keeps the XLU free of lane-reduces.
        logits = jnp.dot(x, w_ref[...], preferred_element_type=jnp.float32)
    else:
        # Very wide rows: VPU multiply + lane reduce (weight row is VMEM-cheap).
        logits = jnp.sum(x * w_ref[...], axis=-1, keepdims=True)
    o_ref[...] = jax.nn.sigmoid(logits + b_ref[0]).astype(o_ref.dtype)


def classifier_forward(x, weight_row, bias):
    """Forward pass of ClassifierModel.

    x:          (B, nInputs) float32 or bfloat16
    weight_row: (1, nInputs) float32  (nn.Linear weight layout)
    bias:       (1,)         float32
    returns:    (B, 1)       x.dtype  == sigmoid(x @ weight_row.T + bias)
    """
    B, K = x.shape
    weight_row = weight_row.astype(jnp.float32)
    bias = bias.astype(jnp.float32)

    vmem_limit, tile_budget = _vmem_config()

    # Choose the reduction path: MXU dot when the lane-padded (K,1) weight
    # column (double-buffered) stays small in VMEM; otherwise the (1,K) row.
    w_col_vmem = _round_up(K, 8) * 128 * 4 * 2
    use_mxu = w_col_vmem <= _W_COL_VMEM_CAP
    if use_mxu:
        w_arg = weight_row.reshape(K, 1)
        w_vmem_bytes = w_col_vmem
        w_spec = pl.BlockSpec((K, 1), lambda i: (0, 0))       # resident column
    else:
        w_arg = weight_row
        w_vmem_bytes = 8 * _round_up(K, 128) * 4 * 2
        w_spec = pl.BlockSpec((1, K), lambda i: (0, 0))       # resident row

    tm = _choose_block_rows(B, K, x.dtype.itemsize, tile_budget, w_vmem_bytes)
    grid = (pl.cdiv(B, tm),)   # no jnp.pad: partial last block handled by Pallas

    out = pl.pallas_call(
        _classifier_kernel,
        out_shape=jax.ShapeDtypeStruct((B, 1), x.dtype),
        grid_spec=pltpu.PrefetchScalarGridSpec(
            num_scalar_prefetch=0,
            grid=grid,
            in_specs=[
                # Streamed, double-buffered activation tile.
                pl.BlockSpec((tm, K), lambda i: (i, 0)),
                # Grid-resident weight (column for MXU, row for VPU path).
                w_spec,
                # Scalar bias in SMEM (no padded VMEM tile, no per-step DMA).
                pl.BlockSpec(memory_space=pltpu.MemorySpace.SMEM),
            ],
            out_specs=pl.BlockSpec((tm, 1), lambda i: (i, 0)),
        ),
        compiler_params=pltpu.CompilerParams(
            dimension_semantics=("parallel",),
            vmem_limit_bytes=vmem_limit,
        ),
    )(x, w_arg, bias)
    return out


def init_params(key, n_inputs):
    """Mirror the PyTorch module's init:
    - weight: xavier_uniform_ on a (1, nInputs) matrix
    - bias:   PyTorch default Linear bias init U(-1/sqrt(fan_in), 1/sqrt(fan_in))
    """
    kw, kb = jax.random.split(key)
    fan_in, fan_out = n_inputs, 1
    bound_w = jnp.sqrt(6.0 / (fan_in + fan_out))
    weight_row = jax.random.uniform(
        kw, (fan_out, fan_in), jnp.float32, minval=-bound_w, maxval=bound_w)
    bound_b = 1.0 / jnp.sqrt(fan_in)
    bias = jax.random.uniform(
        kb, (fan_out,), jnp.float32, minval=-bound_b, maxval=bound_b)
    return weight_row, bias


if __name__ == "__main__":
    key = jax.random.PRNGKey(0)
    kx, kp, kx2, kp2 = jax.random.split(key, 4)

    # Primary check (small shapes consistent with the module).
    B, N_INPUTS = 8, 32
    x = jax.random.normal(kx, (B, N_INPUTS), dtype=jnp.float32)
    weight_row, bias = init_params(kp, N_INPUTS)
    out = jax.block_until_ready(classifier_forward(x, weight_row, bias))
    ref = jax.nn.sigmoid(x @ weight_row.T + bias[None, :])
    assert out.shape == (B, 1)
    assert jnp.allclose(out, ref, atol=1e-5, rtol=1e-5)

    # Exercise the multi-tile / partial-last-block path (no jnp.pad anywhere).
    B2, N2 = 50, 160
    x2 = jax.random.normal(kx2, (B2, N2), dtype=jnp.float32)
    w2, b2 = init_params(kp2, N2)
    out2 = jax.block_until_ready(classifier_forward(x2, w2, b2))
    ref2 = jax.nn.sigmoid(x2 @ w2.T + b2[None, :])
    assert out2.shape == (B2, 1)
    assert jnp.allclose(out2, ref2, atol=1e-5, rtol=1e-5)

    print("KERNEL_OK")
</pallas_src>

<mosaic_0001>
module attributes {stable_mosaic.version = 11 : i64} {
  func.func @_classifier_kernel(%arg0: i32, %arg1: memref<8x32xf32, #tpu.memory_space<vmem>>, %arg2: memref<32x1xf32, #tpu.memory_space<vmem>>, %arg3: memref<1xf32, #tpu.memory_space<smem>>, %arg4: memref<8x1xf32, #tpu.memory_space<vmem>>) attributes {dimension_semantics = [#tpu.dimension_semantics<parallel>], iteration_bounds = array<i64: 1>, scalar_prefetch = 0 : i64, scratch_operands = 0 : i64, tpu.core_type = #tpu.core_type<tc>, window_params = [{transform_indices = @transform_0, window_bounds = array<i64: 8, 32>}, {pipeline_mode = #tpu.pipeline_mode<synchronous>, transform_indices = @transform_1, window_bounds = array<i64: 32, 1>}, {transform_indices = @transform_2, window_bounds = array<i64: 1>}, {transform_indices = @transform_3, window_bounds = array<i64: 8, 1>}]} {
    %c0 = arith.constant 0 : index
    %c0_0 = arith.constant 0 : index
    %0 = vector.load %arg1[%c0, %c0_0] : memref<8x32xf32, #tpu.memory_space<vmem>>, vector<8x32xf32>
    %c0_1 = arith.constant 0 : index
    %c0_2 = arith.constant 0 : index
    %1 = vector.load %arg2[%c0_1, %c0_2] : memref<32x1xf32, #tpu.memory_space<vmem>>, vector<32x1xf32>
    %cst = arith.constant dense<0.000000e+00> : vector<8x1xf32>
    %2 = tpu.matmul %0, %1, %cst {dimension_numbers = #tpu.dot_dimension_numbers<[1], [0], [0], [1], [0, 0, 1, 1], [], []>} : vector<8x32xf32>, vector<32x1xf32>, vector<8x1xf32> -> vector<8x1xf32>
    %c0_3 = arith.constant 0 : index
    %3 = memref.load %arg3[%c0_3] : memref<1xf32, #tpu.memory_space<smem>>
    %4 = vector.broadcast %3 : f32 to vector<8x1xf32>
    %5 = arith.addf %2, %4 : vector<8x1xf32>
    %6 = arith.negf %5 : vector<8x1xf32>
    %7 = math.exp %6 : vector<8x1xf32>
    %cst_4 = arith.constant 1.000000e+00 : f32
    %8 = vector.broadcast %cst_4 : f32 to vector<8x1xf32>
    %9 = arith.addf %8, %7 : vector<8x1xf32>
    %10 = arith.divf %8, %9 : vector<8x1xf32>
    %c0_5 = arith.constant 0 : index
    %c0_6 = arith.constant 0 : index
    %11 = vector.load %arg4[%c0_5, %c0_6] : memref<8x1xf32, #tpu.memory_space<vmem>>, vector<8x1xf32>
    tpu.vector_store %arg4[%c0_5, %c0_6], %10 {strides = array<i32>} : memref<8x1xf32, #tpu.memory_space<vmem>>, vector<8x1xf32>,
    return
  }
  func.func @transform_0(%arg0: i32) -> (i32, i32) {
    %c0_i32 = arith.constant 0 : i32
    %c0_i32_0 = arith.constant 0 : i32
    return %arg0, %c0_i32 : i32, i32
  }
  func.func @transform_1(%arg0: i32) -> (i32, i32) {
    %c0_i32 = arith.constant 0 : i32
    %c0_i32_0 = arith.constant 0 : i32
    %c0_i32_1 = arith.constant 0 : i32
    return %c0_i32, %c0_i32_0 : i32, i32
  }
  func.func @transform_2(%arg0: i32) -> i32 {
    %c0_i32 = arith.constant 0 : i32
    %c0_i32_0 = arith.constant 0 : i32
    return %c0_i32 : i32
  }
  func.func @transform_3(%arg0: i32) -> (i32, i32) {
    %c0_i32 = arith.constant 0 : i32
    %c0_i32_0 = arith.constant 0 : i32
    return %arg0, %c0_i32 : i32, i32
  }
}

</mosaic_0001>

<llo_original>
// kernel: tpu_custom_call.1
$region0: #{tpu_custom_call.1}
  #allocation0 [shape = 'u32[]', space=smem, size = 0x4, offset = 0x4, fixed_abs, tag = 'smem constant byte address 0x4 - core index']
  #allocation1 [shape = 'u32[72,128]{1,0:T(1,128)}', space=vmem, size = 0x9000, scoped, tag = 'internal scratch']
  #allocation2 [shape = 'f32[1]{0:T(128)S(6)}', space=smem, size = 0x200, scoped, tag = 'scoped memory for tpu_custom_call.1']
  %s0 = inlined_call_operand.vmem [shape: f32[8,32], index: 0, kind: input, shape index: {}]
  %s1 = inlined_call_operand.vmem [shape: f32[32,1], index: 1, kind: input, shape index: {}]
  %s2 = inlined_call_operand.<no memory space> [shape: f32[1], index: 2, kind: input, shape index: {}]
  %s3 = inlined_call_operand.vmem [shape: f32[8,1], index: 3, kind: output, shape index: {}]
  %s4 = sld [smem:[#allocation0]]
  $region22: #{tpu_custom_call.1} parent=0
    _
  %s6 = ssub.s32 1, %s4
  %s7 = scalar_select 0, %s6, %s4
  %8 = sst [smem:[#allocation2]] %s2
  // Predicated region
  $region2: #{tpu_custom_call.1} parent=0 // pred_check
    _
  $region3: #{tpu_custom_call.1} parent=0 // pred_check_branch
    %10 = sbr.rel (0) target = $region5
  $region4: #{tpu_custom_call.1} parent=0 // pred_region
    _
  $region5: #{tpu_custom_call.1} parent=0 // pred_fallthru
    _
  // Predicated region
  $region6: #{tpu_custom_call.1} parent=0 // pred_check
    _
  $region7: #{tpu_custom_call.1} parent=0 // pred_check_branch
    %12 = sbr.rel (0) target = $region9
  $region8: #{tpu_custom_call.1} parent=0 // pred_region
    _
  $region9: #{tpu_custom_call.1} parent=0 // pred_fallthru
    _
  // Predicated region
  $region10: #{tpu_custom_call.1} parent=0 // pred_check
    _
  $region11: #{tpu_custom_call.1} parent=0 // pred_check_branch
    %14 = sbr.rel (0) target = $region13
  $region12: #{tpu_custom_call.1} parent=0 // pred_region
    _
  $region13: #{tpu_custom_call.1} parent=0 // pred_fallthru
    _
  %v15 = vld [vmem:[%s0] sm:$0xff]
  %v16 = vld [vmem:[%s1] sm:$0xff]
  %v17 = vld [vmem:[%s1 + $0x8] sm:$0xff]
  %v18 = vld [vmem:[%s1 + $0x10] sm:$0xff]
  %v19 = vld [vmem:[%s1 + $0x18] sm:$0xff]
  %s20 = sld [smem:[#allocation2]]
  %v21 = vstv %s20
  %vm22 = vcmask 261120
  %v24 = vsel %vm22, %v15, 0
  %26 = vmatpush.msra.mxu0 0.0
  %27 = vmatpush.msra.mxu0 0.0
  %28 = vmatpush.msra.mxu0 0.0
  %29 = vmatpush.msra.mxu0 0.0
  %30 = vmatpush.msra.mxu0 0.0
  %31 = vmatpush.msra.mxu0 0.0
  %32 = vmatpush.msra.mxu0 0.0
  %33 = vmatpush.msra.mxu0 0.0
  %34 = vmatpush.msra.mxu0 0.0
  %35 = vmatpush.msra.mxu0 0.0
  %36 = vmatpush.msra.mxu0 0.0
  %37 = vmatpush.msra.mxu0 0.0
  %38 = vmatpush.msra.mxu0 %v19
  %39 = vmatpush.msra.mxu0 %v18
  %40 = vmatpush.msra.mxu0 %v17
  %41 = vmatpush.msra.mxu0 %v16
  %42 = vmatmul.f32.gmra.mxu0 %v24
  %v43 = vpop.f32.mrf.mxu0
  %v44 = vadd.f32 %v21, %v43
  %45 = vdwg.mxu0
  %v46 = vxor.u32 %v44, 2147483648
  %v47 = vmul.f32 %v46, 1.442695
  %v48 = vpow.pop %v47
  %v49 = vadd.f32 %v48, 1.0
  %v50 = vrcp.pop %v49
  %v51 = vmul.f32 %v49, %v50
  %v52 = vsub.f32 1.0, %v51
  %v53 = vmul.f32 %v50, %v52
  %v54 = vadd.f32 %v50, %v53
  %vm55 = vweird.f32 %v49
  %vm56 = vweird.f32 %v50
  %vm57 = vmor %vm55, %vm56
  %v58 = vsel %vm57, %v50, %v54
  %v59 = vand.u32 2147483647, %v49
  %vm60 = vcmp.eq.f32.partialorder %v59, 8.507059e+37
  %v61 = vand.u32 %v49, 2147483648
  %v62 = vor.u32 1.1754944e-38, %v61
  %v63 = vsel %vm60, %v62, %v58
  %v64 = vmul.f32 1.0, %v63
  %vm65 = vcmask 7168
  %66 = vst.msk [vmem:[%s3] sm:$0xff] %vm65, %v64
  // Predicated region
  $region14: #{tpu_custom_call.1} parent=0 // pred_check
    _
  $region15: #{tpu_custom_call.1} parent=0 // pred_check_branch
    %68 = sbr.rel (0) target = $region17
  $region16: #{tpu_custom_call.1} parent=0 // pred_region
    _
  $region17: #{tpu_custom_call.1} parent=0 // pred_fallthru
    _
  // Predicated region
  $region18: #{tpu_custom_call.1} parent=0 // pred_check
    _
  $region19: #{tpu_custom_call.1} parent=0 // pred_check_branch
    %70 = sbr.rel (0) target = $region21
  $region20: #{tpu_custom_call.1} parent=0 // pred_region
    _
  $region21: #{tpu_custom_call.1} parent=0 // pred_fallthru
    _

</llo_original>
